<compile_context>
chip_gen: v7x
topology: tpu7x:2x2x1
jax: 0.10.0
libtpu: 0.0.40
codegen_flags: <defaults>
</compile_context>

<pallas_src>
import functools
import math

import jax
import jax.numpy as jnp
from jax.experimental import pallas as pl
from jax.experimental.pallas import tpu as pltpu


MXU_DTYPE = jnp.bfloat16  # matmul operand dtype (f32 accumulation)


# -----------------------------------------------------------------------------
# helpers: 16-aligned row tiling (+ zero padding only when needed)
# -----------------------------------------------------------------------------
def _round_up(x, m):
    return (x + m - 1) // m * m


def _row_grid(m, max_bm=512):
    if m > max_bm:
        bm = max_bm
    elif m >= 256:
        bm = _round_up((m + 1) // 2, 16)   # >=2 grid steps: pipelining / 2 TCs
    else:
        bm = _round_up(m, 16)
    mp = _round_up(m, bm)
    return bm, mp


def _pad_rows(a, mp):
    m = a.shape[0]
    if m == mp:
        return a
    pad = ((0, mp - m),) + ((0, 0),) * (a.ndim - 1)
    return jnp.pad(a, pad)


def _mdot(a, b):
    return jnp.dot(a.astype(MXU_DTYPE), b.astype(MXU_DTYPE),
                   preferred_element_type=jnp.float32)


# -----------------------------------------------------------------------------
# Pallas kernel 1: node embedding linear, tiled over rows
# -----------------------------------------------------------------------------
def _linear_kernel(x_ref, w_ref, b_ref, o_ref):
    o_ref[...] = (_mdot(x_ref[...], w_ref[...]) + b_ref[...]).astype(o_ref.dtype)


def linear(x, w, b):
    m, kin = x.shape
    n = w.shape[1]
    bm, mp = _row_grid(m)
    xp = _pad_rows(x, mp)
    out = pl.pallas_call(
        _linear_kernel,
        out_shape=jax.ShapeDtypeStruct((mp, n), jnp.float32),
        grid=(mp // bm,),
        in_specs=[
            pl.BlockSpec((bm, kin), lambda i: (i, 0)),
            pl.BlockSpec((kin, n), lambda i: (0, 0)),
            pl.BlockSpec((1, n), lambda i: (0, 0)),
        ],
        out_specs=pl.BlockSpec((bm, n), lambda i: (i, 0)),
        compiler_params=pltpu.CompilerParams(dimension_semantics=("parallel",)),
    )(xp, w.astype(MXU_DTYPE), b.reshape(1, n))
    return out[:m]


# -----------------------------------------------------------------------------
# Pallas kernel 2: fused EGNN edge kernel.
# radial (in-kernel) + edge MLP (2 layers, SiLU) + coord MLP (layer1 MXU,
# gate cm as a VPU lane-reduce) + trans = diff * cm.
# W1 is split by input slice so [hi, hj, radial, edge_fea] never concatenates.
# -----------------------------------------------------------------------------
def _edge_kernel(hi_ref, hj_ref, diff_ref, ef_ref,
                 w1hi_ref, w1hj_ref, w1r_ref, w1e_ref, b1_ref,
                 w2_ref, b2_ref,
                 cw1_ref, cb1_ref, cw2_ref, cb2_ref,
                 m_ref, tr_ref):
    diff = diff_ref[...]                                   # (bm, 3) f32
    radial = jnp.sum(diff * diff, axis=-1, keepdims=True)  # (bm, 1) f32
    t = (jnp.dot(hi_ref[...], w1hi_ref[...], preferred_element_type=jnp.float32)
         + jnp.dot(hj_ref[...], w1hj_ref[...], preferred_element_type=jnp.float32)
         + radial * w1r_ref[...]                           # (bm,1)*(1,n1) VPU
         + jnp.dot(ef_ref[...], w1e_ref[...], preferred_element_type=jnp.float32)
         + b1_ref[...])
    t = t * jax.nn.sigmoid(t)
    m = _mdot(t, w2_ref[...]) + b2_ref[...]
    m = m * jax.nn.sigmoid(m)
    c = _mdot(m, cw1_ref[...]) + cb1_ref[...]
    c = c * jax.nn.sigmoid(c)
    # coordinate gate as a lane-reduce (keeps the MXU/vex slot free)
    cm = jnp.sum(c * cw2_ref[...], axis=-1, keepdims=True) + cb2_ref[...]
    m_ref[...] = m
    tr_ref[...] = diff * cm


def edge_mlp(lp, hi, hj, diff, edge_fea):
    E = hi.shape[0]
    h_dim = hi.shape[1]
    fe = edge_fea.shape[1]
    n1 = lp["edge_w1"].shape[1]
    bm, ep = _row_grid(E)
    pad = lambda a: _pad_rows(a, ep)

    w1 = lp["edge_w1"].astype(MXU_DTYPE)
    w1hi, w1hj = w1[:h_dim], w1[h_dim:2 * h_dim]
    w1r, w1e = w1[2 * h_dim:2 * h_dim + 1], w1[2 * h_dim + 1:]

    row = lambda cols: pl.BlockSpec((bm, cols), lambda i: (i, 0))
    full = lambda r, c: pl.BlockSpec((r, c), lambda i: (0, 0))

    m, tr = pl.pallas_call(
        _edge_kernel,
        out_shape=(jax.ShapeDtypeStruct((ep, n1), jnp.float32),
                   jax.ShapeDtypeStruct((ep, 3), jnp.float32)),
        grid=(ep // bm,),
        in_specs=[row(h_dim), row(h_dim), row(3), row(fe),
                  full(h_dim, n1), full(h_dim, n1), full(1, n1), full(fe, n1),
                  full(1, n1),
                  full(n1, n1), full(1, n1),
                  full(n1, n1), full(1, n1),
                  full(1, n1), full(1, 1)],
        out_specs=(row(n1), row(3)),
        compiler_params=pltpu.CompilerParams(dimension_semantics=("parallel",)),
    )(pad(hi), pad(hj), pad(diff), pad(edge_fea),
      w1hi, w1hj, w1r, w1e, lp["edge_b1"].reshape(1, n1),
      lp["edge_w2"].astype(MXU_DTYPE), lp["edge_b2"].reshape(1, n1),
      lp["coord_w1"].astype(MXU_DTYPE), lp["coord_b1"].reshape(1, n1),
      lp["coord_w2"].reshape(1, n1), lp["coord_b2"].reshape(1, 1))
    return m[:E], tr[:E]


# -----------------------------------------------------------------------------
# Pallas kernel 3: fused EGNN node kernel, batched over `groups`.
# The SAME (num_nodes, num_edges) incidence is reused for every group
# (block-diagonal decoder structure: one group per timestep), so aggregation
# scales with T instead of T^2.  Aggregation kept in f32 (exact 0/1 incidence).
# -----------------------------------------------------------------------------
def _node_kernel(inc_ref, tr_ref, m_ref, h_ref, x_ref,
                 w1h_ref, w1m_ref, b1_ref, w2_ref, b2_ref,
                 xo_ref, ho_ref):
    inc = inc_ref[...]                                               # (Nn, E) f32
    x_agg = jnp.dot(inc, tr_ref[0], preferred_element_type=jnp.float32)  # (Nn,3)
    m_agg = jnp.dot(inc, m_ref[0], preferred_element_type=jnp.float32)   # (Nn,mc)
    h = h_ref[0]                                                     # (Nn, hd)
    t = _mdot(h, w1h_ref[...]) + _mdot(m_agg, w1m_ref[...]) + b1_ref[...]
    t = t * jax.nn.sigmoid(t)
    dh = _mdot(t, w2_ref[...]) + b2_ref[...]
    xo_ref[...] = x_ref[...] + x_agg[None]
    ho_ref[...] = h_ref[...] + dh[None]


def node_update(lp, inc, trans, m, h, x, groups):
    G = groups
    GN, hd = h.shape
    Nn = GN // G
    E = trans.shape[0] // G
    mc = m.shape[1]
    n1 = lp["node_w1"].shape[1]

    w1 = lp["node_w1"].astype(MXU_DTYPE)
    w1h, w1m = w1[:hd], w1[hd:]
    w2 = lp["node_w2"].astype(MXU_DTYPE)

    # per-group views (contiguous reshapes, no data movement)
    trans_g = trans.reshape(G, E, 3)
    m_g = m.reshape(G, E, mc)
    h_g = h.reshape(G, Nn, hd)
    x_g = x.reshape(G, Nn, 3)

    # TODO(synk): for very large graphs, additionally tile E as an 'arbitrary'
    # reduction grid axis (VMEM accumulator) or use a segment-sum; the per-group
    # (Nn, E) incidence is assumed to fit VMEM here.
    x_out, h_out = pl.pallas_call(
        _node_kernel,
        out_shape=(jax.ShapeDtypeStruct((G, Nn, 3), jnp.float32),
                   jax.ShapeDtypeStruct((G, Nn, hd), jnp.float32)),
        grid=(G,),
        in_specs=[
            pl.BlockSpec((Nn, E), lambda g: (0, 0)),       # shared incidence
            pl.BlockSpec((1, E, 3), lambda g: (g, 0, 0)),
            pl.BlockSpec((1, E, mc), lambda g: (g, 0, 0)),
            pl.BlockSpec((1, Nn, hd), lambda g: (g, 0, 0)),
            pl.BlockSpec((1, Nn, 3), lambda g: (g, 0, 0)),
            pl.BlockSpec((hd, n1), lambda g: (0, 0)),
            pl.BlockSpec((mc, n1), lambda g: (0, 0)),
            pl.BlockSpec((1, n1), lambda g: (0, 0)),
            pl.BlockSpec((n1, hd), lambda g: (0, 0)),
            pl.BlockSpec((1, hd), lambda g: (0, 0)),
        ],
        out_specs=(pl.BlockSpec((1, Nn, 3), lambda g: (g, 0, 0)),
                   pl.BlockSpec((1, Nn, hd), lambda g: (g, 0, 0))),
        compiler_params=pltpu.CompilerParams(dimension_semantics=("parallel",)),
    )(inc, trans_g, m_g, h_g, x_g,
      w1h, w1m, lp["node_b1"].reshape(1, n1),
      w2, lp["node_b2"].reshape(1, hd))
    return x_out.reshape(GN, 3), h_out.reshape(GN, hd)


def egnn_layer(lp, x, h, edge_index, edge_fea_b, v, inc, groups):
    row, col = edge_index
    h_b = h.astype(MXU_DTYPE)                 # gather directly in bf16 (half DMA)
    # TODO(synk): hi/hj/x gathers are XLA glue; a scalar-prefetch in-kernel
    # gather (h/x left in HBM) would remove these extra HBM passes.
    hi = jnp.take(h_b, row, axis=0)
    hj = jnp.take(h_b, col, axis=0)
    diff = jnp.take(x, row, axis=0) - jnp.take(x, col, axis=0)   # f32 (radial/trans)
    m, trans = edge_mlp(lp, hi, hj, diff, edge_fea_b)
    x, h = node_update(lp, inc, trans, m, h, x, groups)
    return x, v, h


# -----------------------------------------------------------------------------
# Pallas kernel 4: TimeConvODE (graph-Fourier spectral temporal conv on h).
# grid=(B,): t-independent spectral core once per graph; all T timesteps are
# emitted with a single broadcast store o = h + t*delta (t is a (T,1,1,1) block).
# -----------------------------------------------------------------------------
def _freq_conv_h_kernel(t_ref, h_ref, ut_ref, u_ref, wt_ref, b_ref, o_ref):
    h = h_ref[0]                                                      # (N, d)
    hc = jnp.dot(ut_ref[0], h, preferred_element_type=jnp.float32)    # (K, d)
    # per-mode map: g[k, e] = sum_d hc[k, d] * W[k, d, e]   (wt is (K, e, d))
    # (kept as VPU broadcast + reduce; use a K-batched dot_general once d>=128)
    g = jnp.sum(wt_ref[...] * hc[:, None, :], axis=-1) + b_ref[...]   # (K, d)
    delta = jnp.dot(u_ref[0], g, preferred_element_type=jnp.float32)  # (N, d)
    delta = delta * jax.nn.sigmoid(delta)                             # SiLU
    # one vectorized store for all T timesteps
    o_ref[...] = h[None, None] + t_ref[...] * delta[None, None]       # (T,1,N,d)


def freq_conv_h(h_bnd, t4, u_k, ut_k, w_modes, b_modes):
    B, N, d = h_bnd.shape
    T = t4.shape[0]
    K = w_modes.shape[0]
    wt = jnp.swapaxes(w_modes, 1, 2)                                  # (K, d_out, d_in)
    return pl.pallas_call(
        _freq_conv_h_kernel,
        out_shape=jax.ShapeDtypeStruct((T, B, N, d), jnp.float32),
        grid=(B,),
        in_specs=[
            pl.BlockSpec((T, 1, 1, 1), lambda b: (0, b, 0, 0)),
            pl.BlockSpec((1, N, d), lambda b: (b, 0, 0)),
            pl.BlockSpec((1, K, N), lambda b: (b, 0, 0)),
            pl.BlockSpec((1, N, K), lambda b: (b, 0, 0)),
            pl.BlockSpec((K, d, d), lambda b: (0, 0, 0)),
            pl.BlockSpec((K, d), lambda b: (0, 0)),
        ],
        out_specs=pl.BlockSpec((T, 1, N, d), lambda b: (0, b, 0, 0)),
        compiler_params=pltpu.CompilerParams(dimension_semantics=("parallel",)),
    )(t4, h_bnd, ut_k, u_k, wt, b_modes)


# -----------------------------------------------------------------------------
# Pallas kernel 5: TimeConvODE_x (equivariant spectral temporal conv on (x, v)).
# Same t-vectorized structure; loc_mean is added back inside the kernel so the
# wrapper never rewrites the (T*num_nodes, 3) output.
# -----------------------------------------------------------------------------
def _freq_conv_x_kernel(t_ref, lm_ref, x0_ref, x1_ref, ut_ref, u_ref, w_ref,
                        o0_ref, o1_ref):
    x0 = x0_ref[0]                                                    # (N, 3)
    x1 = x1_ref[0]
    ut = ut_ref[0]
    u = u_ref[0]
    c0 = jnp.dot(ut, x0, preferred_element_type=jnp.float32)          # (K, 3)
    c1 = jnp.dot(ut, x1, preferred_element_type=jnp.float32)
    w = w_ref[...]                                                    # (K, 4)
    g0 = c0 * w[:, 0:1] + c1 * w[:, 2:3]
    g1 = c0 * w[:, 1:2] + c1 * w[:, 3:4]
    d0 = jnp.dot(u, g0, preferred_element_type=jnp.float32)           # (N, 3)
    d1 = jnp.dot(u, g1, preferred_element_type=jnp.float32)
    t = t_ref[...]                                                    # (T,1,1,1)
    base = (x0 + lm_ref[0])[None, None]                               # x (untranslated)
    o0_ref[...] = base + t * d0[None, None]
    o1_ref[...] = x1[None, None] + t * d1[None, None]


def freq_conv_x(x0_bn3, x1_bn3, lm_bn3, t4, u_k, ut_k, wx_flat):
    B, N, _ = x0_bn3.shape
    T = t4.shape[0]
    K = wx_flat.shape[0]
    return pl.pallas_call(
        _freq_conv_x_kernel,
        out_shape=(jax.ShapeDtypeStruct((T, B, N, 3), jnp.float32),
                   jax.ShapeDtypeStruct((T, B, N, 3), jnp.float32)),
        grid=(B,),
        in_specs=[
            pl.BlockSpec((T, 1, 1, 1), lambda b: (0, b, 0, 0)),
            pl.BlockSpec((1, N, 3), lambda b: (b, 0, 0)),
            pl.BlockSpec((1, N, 3), lambda b: (b, 0, 0)),
            pl.BlockSpec((1, N, 3), lambda b: (b, 0, 0)),
            pl.BlockSpec((1, K, N), lambda b: (b, 0, 0)),
            pl.BlockSpec((1, N, K), lambda b: (b, 0, 0)),
            pl.BlockSpec((K, 4), lambda b: (0, 0)),
        ],
        out_specs=(pl.BlockSpec((T, 1, N, 3), lambda b: (0, b, 0, 0)),
                   pl.BlockSpec((T, 1, N, 3), lambda b: (0, b, 0, 0))),
        compiler_params=pltpu.CompilerParams(dimension_semantics=("parallel",)),
    )(t4, lm_bn3, x0_bn3, x1_bn3, ut_k, u_k, wx_flat)


# -----------------------------------------------------------------------------
# sinusoidal timestep embedding (tiny, plain-JAX glue)
# -----------------------------------------------------------------------------
def get_timestep_embedding(timesteps, embedding_dim, max_positions=10000):
    half = embedding_dim // 2
    emb = math.log(max_positions) / max(half - 1, 1)
    freqs = jnp.exp(jnp.arange(half, dtype=jnp.float32) * -emb)
    args = timesteps.astype(jnp.float32)[..., None] * freqs
    return jnp.concatenate([jnp.sin(args), jnp.cos(args)], axis=-1)


# -----------------------------------------------------------------------------
# FourierMD forward
# -----------------------------------------------------------------------------
def fourier_md_forward(params, cfg, x, h, edge_index, edge_fea, v,
                       loc_mean, timeframes, U_batch):
    N = cfg["num_atoms"]
    T = cfg["num_timesteps"]
    num_nodes = h.shape[0]
    num_edges = edge_index[0].shape[0]
    B = num_nodes // N

    # node embedding
    h = linear(h, params["embedding_w"], params["embedding_b"])

    # incidence built ONCE per edge set; reused per timestep in the decoder
    inc = jax.nn.one_hot(edge_index[0], num_nodes, dtype=jnp.float32).T
    edge_fea_b = edge_fea.astype(MXU_DTYPE)

    # encoder GNN
    for lp in params["encode_layers"]:
        x, v, h = egnn_layer(lp, x, h, edge_index, edge_fea_b, v, inc, groups=1)

    kld_loss = jnp.float32(0.0)  # use_vae=False

    t_norm = (timeframes / cfg["delta_frame"]).astype(jnp.float32)     # (B, T)
    t4 = jnp.transpose(t_norm).reshape(T, B, 1, 1)                     # (T, B, 1, 1)
    u_k = U_batch[:, :, :cfg["num_modes"]]                             # (B, N, K)
    ut_k = jnp.swapaxes(u_k, 1, 2)                                     # (B, K, N)

    # h temporal propagation (propagate_h=True)
    h_bnd = h.reshape(B, N, -1)
    h_T = freq_conv_h(h_bnd, t4, u_k, ut_k,
                      params["freq_w"], params["freq_b"])              # (T,B,N,d)

    # x / v temporal propagation (propagate_x=True); loc_mean fused in-kernel
    x_translated = x - loc_mean
    x0 = x_translated.reshape(B, N, 3)
    x1 = v.reshape(B, N, 3)
    lm = loc_mean.reshape(B, N, 3)
    out0, out1 = freq_conv_x(x0, x1, lm, t4, u_k, ut_k, params["freq_x_w"])
    x = out0.reshape(T * num_nodes, 3)
    v = out1.reshape(T * num_nodes, 3)

    # time embedding and concat with h
    time_emb = get_timestep_embedding(timeframes, cfg["time_emb_dim"])  # (B,T,E)
    time_emb = jnp.repeat(time_emb[:, :, None, :], N, axis=2)           # (B,T,N,E)
    time_emb = jnp.swapaxes(time_emb, 0, 1).reshape(T, num_nodes, -1)
    h = h_T.reshape(T, num_nodes, -1)
    h = jnp.concatenate([h, time_emb], axis=-1).reshape(T * num_nodes, -1)

    # expand edges over T timesteps (only needed for the gathers; the node
    # aggregation reuses the per-timestep incidence via groups=T)
    cumsum = jnp.arange(T, dtype=jnp.int32) * num_nodes
    cumsum_edges = jnp.repeat(cumsum, num_edges)
    e0 = jnp.tile(edge_index[0], (T,)) + cumsum_edges
    e1 = jnp.tile(edge_index[1], (T,)) + cumsum_edges
    edge_fea_T = jnp.tile(edge_fea_b, (T, 1))

    # decoder GNN (block-diagonal aggregation: groups=T, shared incidence)
    for lp in params["decode_layers"]:
        x, v, h = egnn_layer(lp, x, h, (e0, e1), edge_fea_T, v, inc, groups=T)

    return x, v, h, kld_loss


# -----------------------------------------------------------------------------
# deterministic parameter initialization
# -----------------------------------------------------------------------------
def _init_lin(key, fan_in, fan_out, scale=None):
    if scale is None:
        scale = 1.0 / math.sqrt(fan_in)
    w = scale * jax.random.normal(key, (fan_in, fan_out), jnp.float32)
    b = jnp.zeros((fan_out,), jnp.float32)
    return w, b


def init_egnn_layer(key, hid, in_edge_nf):
    ks = jax.random.split(key, 6)
    p = {}
    p["edge_w1"], p["edge_b1"] = _init_lin(ks[0], 2 * hid + 1 + in_edge_nf, hid)
    p["edge_w2"], p["edge_b2"] = _init_lin(ks[1], hid, hid)
    p["coord_w1"], p["coord_b1"] = _init_lin(ks[2], hid, hid)
    p["coord_w2"], p["coord_b2"] = _init_lin(ks[3], hid, 1, scale=0.01)
    p["node_w1"], p["node_b1"] = _init_lin(ks[4], 2 * hid, hid)
    p["node_w2"], p["node_b2"] = _init_lin(ks[5], hid, hid)
    return p


def init_params(key, cfg):
    n_layers = cfg["n_layers"]
    hid = cfg["hidden_nf"]
    dec_hid = hid + cfg["time_emb_dim"]
    K = cfg["num_modes"]
    keys = jax.random.split(key, 4 + 2 * n_layers)
    params = {}
    params["embedding_w"], params["embedding_b"] = _init_lin(
        keys[0], cfg["in_node_nf"], hid)
    params["encode_layers"] = [
        init_egnn_layer(keys[1 + i], hid, cfg["in_edge_nf"])
        for i in range(n_layers)]
    params["decode_layers"] = [
        init_egnn_layer(keys[1 + n_layers + i], dec_hid, cfg["in_edge_nf"])
        for i in range(n_layers)]
    scale = 1.0 / hid
    params["freq_w"] = scale * jax.random.normal(
        keys[1 + 2 * n_layers], (K, hid, hid), jnp.float32)
    params["freq_b"] = jnp.zeros((K, hid), jnp.float32)
    params["freq_x_w"] = 0.25 * jax.random.normal(
        keys[2 + 2 * n_layers], (K, 4), jnp.float32)  # flattened (K, 2, 2)
    return params


# -----------------------------------------------------------------------------
if __name__ == "__main__":
    cfg = dict(
        n_layers=2, in_node_nf=4, in_edge_nf=2, hidden_nf=32,
        num_modes=2, num_timesteps=8, time_emb_dim=32, num_atoms=5,
        delta_frame=10.0,
    )
    B = 2
    N = cfg["num_atoms"]
    T = cfg["num_timesteps"]
    num_nodes = B * N

    key = jax.random.PRNGKey(0)
    kp, kx, kh, ke, kv, ku = jax.random.split(key, 6)

    params = init_params(kp, cfg)

    x = jax.random.normal(kx, (num_nodes, 3), jnp.float32)
    h = jax.random.normal(kh, (num_nodes, cfg["in_node_nf"]), jnp.float32)
    v = 0.1 * jax.random.normal(kv, (num_nodes, 3), jnp.float32)

    # fully-connected (no self-loop) edges inside each of the B graphs
    rows, cols = [], []
    for b in range(B):
        for i in range(N):
            for j in range(N):
                if i != j:
                    rows.append(b * N + i)
                    cols.append(b * N + j)
    edge_index = (jnp.array(rows, dtype=jnp.int32),
                  jnp.array(cols, dtype=jnp.int32))
    num_edges = edge_index[0].shape[0]
    edge_fea = jax.random.normal(ke, (num_edges, cfg["in_edge_nf"]), jnp.float32)

    # per-graph mean location (as the caller would supply)
    loc_mean = jnp.broadcast_to(
        x.reshape(B, N, 3).mean(axis=1, keepdims=True), (B, N, 3)
    ).reshape(num_nodes, 3)

    # timeframes per batch, shape (B, T)
    timeframes = jnp.tile(jnp.arange(1, T + 1, dtype=jnp.float32), (B, 1))

    # graph Fourier basis: orthonormal columns per batch graph
    U_batch, _ = jnp.linalg.qr(jax.random.normal(ku, (B, N, N), jnp.float32))

    x_out, v_out, h_out, kld = fourier_md_forward(
        params, cfg, x, h, edge_index, edge_fea, v, loc_mean, timeframes, U_batch)

    jax.block_until_ready((x_out, v_out, h_out, kld))
    assert x_out.shape == (T * num_nodes, 3)
    assert v_out.shape == (T * num_nodes, 3)
    assert h_out.shape == (T * num_nodes, cfg["hidden_nf"] + cfg["time_emb_dim"])
    assert bool(jnp.all(jnp.isfinite(x_out))) and bool(jnp.all(jnp.isfinite(h_out)))
    print("KERNEL_OK")
</pallas_src>

<mosaic_0001>
module attributes {stable_mosaic.version = 11 : i64} {
  func.func @_linear_kernel(%arg0: i32, %arg1: memref<16x4xf32, #tpu.memory_space<vmem>>, %arg2: memref<4x32xbf16, #tpu.memory_space<vmem>>, %arg3: memref<1x32xf32, #tpu.memory_space<vmem>>, %arg4: memref<16x32xf32, #tpu.memory_space<vmem>>) attributes {dimension_semantics = [#tpu.dimension_semantics<parallel>], iteration_bounds = array<i64: 1>, scalar_prefetch = 0 : i64, scratch_operands = 0 : i64, tpu.core_type = #tpu.core_type<tc>, window_params = [{transform_indices = @transform_0, window_bounds = array<i64: 16, 4>}, {pipeline_mode = #tpu.pipeline_mode<synchronous>, transform_indices = @transform_1, window_bounds = array<i64: 4, 32>}, {pipeline_mode = #tpu.pipeline_mode<synchronous>, transform_indices = @transform_2, window_bounds = array<i64: 1, 32>}, {transform_indices = @transform_3, window_bounds = array<i64: 16, 32>}]} {
    %c0 = arith.constant 0 : index
    %c0_0 = arith.constant 0 : index
    %0 = vector.load %arg1[%c0, %c0_0] : memref<16x4xf32, #tpu.memory_space<vmem>>, vector<16x4xf32>
    %c0_1 = arith.constant 0 : index
    %c0_2 = arith.constant 0 : index
    %1 = vector.load %arg2[%c0_1, %c0_2] : memref<4x32xbf16, #tpu.memory_space<vmem>>, vector<4x32xbf16>
    %2 = arith.truncf %0 : vector<16x4xf32> to vector<16x4xbf16>
    %cst = arith.constant dense<0.000000e+00> : vector<16x32xf32>
    %3 = tpu.matmul %2, %1, %cst {dimension_numbers = #tpu.dot_dimension_numbers<[1], [0], [0], [1], [0, 0, 1, 1], [], []>} : vector<16x4xbf16>, vector<4x32xbf16>, vector<16x32xf32> -> vector<16x32xf32>
    %c0_3 = arith.constant 0 : index
    %c0_4 = arith.constant 0 : index
    %4 = vector.load %arg3[%c0_3, %c0_4] : memref<1x32xf32, #tpu.memory_space<vmem>>, vector<1x32xf32>
    %5 = vector.broadcast %4 : vector<1x32xf32> to vector<16x32xf32>
    %6 = arith.addf %3, %5 : vector<16x32xf32>
    %c0_5 = arith.constant 0 : index
    %c0_6 = arith.constant 0 : index
    %7 = vector.load %arg4[%c0_5, %c0_6] : memref<16x32xf32, #tpu.memory_space<vmem>>, vector<16x32xf32>
    tpu.vector_store %arg4[%c0_5, %c0_6], %6 {strides = array<i32>} : memref<16x32xf32, #tpu.memory_space<vmem>>, vector<16x32xf32>,
    return
  }
  func.func @transform_0(%arg0: i32) -> (i32, i32) {
    %c0_i32 = arith.constant 0 : i32
    %c0_i32_0 = arith.constant 0 : i32
    return %arg0, %c0_i32 : i32, i32
  }
  func.func @transform_1(%arg0: i32) -> (i32, i32) {
    %c0_i32 = arith.constant 0 : i32
    %c0_i32_0 = arith.constant 0 : i32
    %c0_i32_1 = arith.constant 0 : i32
    return %c0_i32, %c0_i32_0 : i32, i32
  }
  func.func @transform_2(%arg0: i32) -> (i32, i32) {
    %c0_i32 = arith.constant 0 : i32
    %c0_i32_0 = arith.constant 0 : i32
    %c0_i32_1 = arith.constant 0 : i32
    return %c0_i32, %c0_i32_0 : i32, i32
  }
  func.func @transform_3(%arg0: i32) -> (i32, i32) {
    %c0_i32 = arith.constant 0 : i32
    %c0_i32_0 = arith.constant 0 : i32
    return %arg0, %c0_i32 : i32, i32
  }
}

</mosaic_0001>

<llo_original>
// kernel: tpu_custom_call.1
$region0: #{tpu_custom_call.1}
  #allocation0 [shape = 'u32[]', space=smem, size = 0x4, offset = 0x4, fixed_abs, tag = 'smem constant byte address 0x4 - core index']
  #allocation1 [shape = 'u32[144,128]{1,0:T(1,128)}', space=vmem, size = 0x12000, scoped, tag = 'internal scratch']
  %s0 = inlined_call_operand.vmem [shape: f32[16,4], index: 0, kind: input, shape index: {}]
  %s1 = inlined_call_operand.vmem [shape: bf16[4,32], index: 1, kind: input, shape index: {}]
  %s2 = inlined_call_operand.vmem [shape: f32[1,32], index: 2, kind: input, shape index: {}]
  %s3 = inlined_call_operand.hbm [shape: f32[16,32], index: 3, kind: output, shape index: {}]
  %s4 = sld [smem:[#allocation0]]
  $region22: #{tpu_custom_call.1} parent=0
    _
  %s6 = ssub.s32 1, %s4
  %s7 = scalar_select 0, %s6, %s4
  $region1: #{tpu_custom_call.1} parent=0
    #allocation2 [shape = 'u8[8192]{0}', space=vmem, size = 0x2000, scoped, tag = 'output window, operand 0, single buffered']
    #allocation3 [shape = 's32[1]{0}', space=sflag, size = 0x4, scoped, tag = 'scoped memory for tpu_custom_call.1']
    %8 = vsyncpa [#allocation3], 0
    // Predicated region
    $region2: #{tpu_custom_call.1} parent=1 // pred_check
      _
    $region3: #{tpu_custom_call.1} parent=1 // pred_check_branch
      %10 = sbr.rel (0) target = $region5
    $region4: #{tpu_custom_call.1} parent=1 // pred_region
      _
    $region5: #{tpu_custom_call.1} parent=1 // pred_fallthru
      _
    // Predicated region
    $region6: #{tpu_custom_call.1} parent=1 // pred_check
      _
    $region7: #{tpu_custom_call.1} parent=1 // pred_check_branch
      %12 = sbr.rel (0) target = $region9
    $region8: #{tpu_custom_call.1} parent=1 // pred_region
      _
    $region9: #{tpu_custom_call.1} parent=1 // pred_fallthru
      _
    // Predicated region
    $region10: #{tpu_custom_call.1} parent=1 // pred_check
      _
    $region11: #{tpu_custom_call.1} parent=1 // pred_check_branch
      %14 = sbr.rel (0) target = $region13
    $region12: #{tpu_custom_call.1} parent=1 // pred_region
      _
    $region13: #{tpu_custom_call.1} parent=1 // pred_fallthru
      _
    %v16 = vld [vmem:[%s0] sm:$0xff]
    %v17 = vld [vmem:[%s0 + $0x8] sm:$0xff]
    %v18 = vld [vmem:[%s1] sm:$0x3]
    %v19 = vpack.c.bf16 %v17, %v16
    %v20 = vld [vmem:[%s2] sm:$0x1]
    %v22 = vlaneseq
    %v23 = vshrl.u32 %v22, 7
    %v24 = vsub.s32 0, %v23
    %v25 = vrot.slane %v20, %v24
    %vm27 = vcmask 31744
    %v29 = vsel %vm27, %v19, 0
    %vm31 = vcmask 1041408
    %v33 = vsel %vm31, %v18, 0
    %35 = vmatprep.subr.bf16.mxu0 0
    %36 = vmatpush1.bf16.msra.mxu0 %v33
    %37 = vmatprep.subr.bf16.mxu0 0
    %38 = vmatpush1.bf16.msra.mxu0 0
    %39 = vmatprep.subr.bf16.mxu0 0
    %40 = vmatpush1.bf16.msra.mxu0 0
    %41 = vmatprep.subr.bf16.mxu0 0
    %42 = vmatpush1.bf16.msra.mxu0 0
    %43 = vmatprep.subr.bf16.mxu0 0
    %44 = vmatpush1.bf16.msra.mxu0 0
    %45 = vmatprep.subr.bf16.mxu0 0
    %46 = vmatpush1.bf16.msra.mxu0 0
    %47 = vmatprep.subr.bf16.mxu0 0
    %48 = vmatpush1.bf16.msra.mxu0 0
    %49 = vmatprep.subr.bf16.mxu0 0
    %50 = vmatpush1.bf16.msra.mxu0 0
    %51 = vmatprep.subr.bf16.mxu0 0
    %52 = vmatpush1.bf16.msra.mxu0 0
    %53 = vmatprep.subr.bf16.mxu0 0
    %54 = vmatpush1.bf16.msra.mxu0 0
    %55 = vmatprep.subr.bf16.mxu0 0
    %56 = vmatpush1.bf16.msra.mxu0 0
    %57 = vmatprep.subr.bf16.mxu0 0
    %58 = vmatpush1.bf16.msra.mxu0 0
    %59 = vmatprep.subr.bf16.mxu0 0
    %60 = vmatpush1.bf16.msra.mxu0 0
    %61 = vmatprep.subr.bf16.mxu0 0
    %62 = vmatpush1.bf16.msra.mxu0 0
    %63 = vmatprep.subr.bf16.mxu0 0
    %64 = vmatpush1.bf16.msra.mxu0 0
    %65 = vmatprep.subr.bf16.mxu0 0
    %66 = vmatpush1.bf16.msra.mxu0 0
    %67 = vmatprep.mubr.bf16.mxu0 0
    %68 = vmatmul.mubr.bf16.gmra.mrb[0].mxu0 %v29
    %v69 = vpop.f32.mrb[0].mxu0
    %v70 = vadd.f32 %v25, %v69
    %v71 = vpop.f32.mrb[0].mxu0
    %v72 = vpop.f32.mrb[0].mxu0
    %v73 = vadd.f32 %v25, %v72
    %v74 = vpop.f32.mrb[0].mxu0
    %75 = vdwg.mxu0
    %vm76 = vcmask 261120
    %77 = vst.msk [vmem:[#allocation2] sm:$0xff] %vm76, %v70
    %78 = vst.msk [vmem:[#allocation2 + $0x8] sm:$0xff] %vm76, %v73
    // Predicated region
    $region14: #{tpu_custom_call.1} parent=1 // pred_check
      _
    $region15: #{tpu_custom_call.1} parent=1 // pred_check_branch
      %80 = sbr.rel (0) target = $region17
    $region16: #{tpu_custom_call.1} parent=1 // pred_region
      %s82 = ssub.s32 256, 256
      %83 = vsyncadd [#allocation3], %s82
      %s84 = sshll.u32 [#allocation2], 4
      %s85 = int_to_ptr.vmem [resolvable:$true] %s84
      %90 = dma.vmem_to_hbm [thread:$0]  %s85, 256, %s3, [#allocation3], 128, 128, 8
    $region17: #{tpu_custom_call.1} parent=1 // pred_fallthru
      _
    // Predicated region
    $region18: #{tpu_custom_call.1} parent=1 // pred_check
      _
    $region19: #{tpu_custom_call.1} parent=1 // pred_check_branch
      %92 = sbr.rel (0) target = $region21
    $region20: #{tpu_custom_call.1} parent=1 // pred_region
      %93 = dma.done [#allocation3], 256
    $region21: #{tpu_custom_call.1} parent=1 // pred_fallthru
      _
    %94 = vsyncpa [#allocation3], 1

</llo_original>
